<compile_context>
chip_gen: v7x
topology: tpu7x:2x2x1
jax: 0.10.0
libtpu: 0.0.40
codegen_flags: <defaults>
</compile_context>

<pallas_src>
import math

import jax
import jax.numpy as jnp
from jax.experimental import pallas as pl
from jax.experimental.pallas import tpu as pltpu


def _neuron_comp_kernel(x_ref, w1_ref, w2_ref, b_ref, o_ref):
    # x_ref  : (tb, I*F)   flattened features for this batch tile
    # w1_ref : (I*F, I*H)  block-diagonal first-layer weights
    # w2_ref : (I*H, I*F)  block-diagonal second-layer weights
    # b_ref  : (1, I*F)    flattened final bias
    # o_ref  : (tb, I*F)   output tile (lane-dense last dim)
    x = x_ref[...]
    h = jnp.dot(x, w1_ref[...], preferred_element_type=jnp.float32)
    a = jnp.maximum(h, 0.0)                                    # ReLU (hidden)
    o = jnp.dot(a, w2_ref[...], preferred_element_type=jnp.float32) + b_ref[...]
    o_ref[...] = jnp.maximum(o, 0.0).astype(o_ref.dtype)       # ReLU (output)


def _pick_batch_tile(batch):
    # Prefer >=2 grid steps (v7x has 2 TensorCores) with sublane-aligned
    # (multiple-of-8) tiles, while keeping per-step tiles comfortably inside
    # VMEM (a 1024 x 128 f32 tile is only 512 KiB, double-buffered ~1 MiB).
    for tb in (1024, 512, 256, 128, 64, 32, 16, 8):
        if batch % tb == 0 and batch // tb >= 2:
            return tb
    return batch


def neuron_computation_forward(features, W1, W2, b_final):
    """features: [batch, inst, feats]; W1: [inst, d_hidden, feats];
    W2: [inst, feats, d_hidden]; b_final: [inst, feats]."""
    batch, n_inst, n_feats = features.shape
    d_hidden = W1.shape[1]
    IF = n_inst * n_feats
    IH = n_inst * d_hidden

    # Block-diagonal fold of the per-instance weights (tiny, built in XLA and
    # fused under jit; constant across batch tiles so it stays VMEM-resident).
    eye = jnp.eye(n_inst, dtype=features.dtype)
    w1_bd = jnp.einsum('ij,ihf->ifjh', eye, W1).reshape(IF, IH)   # [I*F, I*H]
    w2_bd = jnp.einsum('ij,ifh->ihjf', eye, W2).reshape(IH, IF)   # [I*H, I*F]
    b_flat = b_final.reshape(1, IF)
    x_flat = features.reshape(batch, IF)                          # free reshape

    tb = _pick_batch_tile(batch)

    out_flat = pl.pallas_call(
        _neuron_comp_kernel,
        out_shape=jax.ShapeDtypeStruct((batch, IF), features.dtype),
        grid_spec=pltpu.PrefetchScalarGridSpec(
            num_scalar_prefetch=0,
            grid=(batch // tb,),
            in_specs=[
                pl.BlockSpec((tb, IF), lambda i: (i, 0)),
                pl.BlockSpec((IF, IH), lambda i: (0, 0)),  # weights stay resident
                pl.BlockSpec((IH, IF), lambda i: (0, 0)),
                pl.BlockSpec((1, IF), lambda i: (0, 0)),
            ],
            out_specs=pl.BlockSpec((tb, IF), lambda i: (i, 0)),
        ),
        compiler_params=pltpu.CompilerParams(
            dimension_semantics=("parallel",),
        ),
    )(x_flat, w1_bd, w2_bd, b_flat)

    return out_flat.reshape(batch, n_inst, n_feats)


# jit the whole wrapper so the block-diagonal fold + reshapes compile once and
# fuse around the pallas_call.
neuron_computation_forward = jax.jit(neuron_computation_forward)


def _kaiming_uniform(key, shape, dtype=jnp.float32):
    # nn.init.kaiming_uniform_ with a=0 default (leaky_relu):
    # fan_in = shape[1] * prod(shape[2:]), bound = sqrt(2) * sqrt(3 / fan_in)
    fan_in = shape[1]
    for d in shape[2:]:
        fan_in *= d
    bound = math.sqrt(2.0) * math.sqrt(3.0 / fan_in)
    return jax.random.uniform(key, shape, dtype=dtype, minval=-bound, maxval=bound)


def _reference_forward(features, W1, W2, b_final):
    # Pure-JAX reference mirroring the PyTorch einsums.
    a = jax.nn.relu(jnp.einsum('bif,ihf->bih', features, W1))
    o = jax.nn.relu(jnp.einsum('bih,ifh->bif', a, W2) + b_final[None])
    return o


if __name__ == "__main__":
    # Small shapes consistent with ToyModelConfig; inst*feats = 128 (lane-dense).
    batch, n_inst, n_features, d_hidden = 16, 4, 32, 8

    key = jax.random.PRNGKey(0)
    k_w1, k_w2, k_x = jax.random.split(key, 3)

    W1 = _kaiming_uniform(k_w1, (n_inst, d_hidden, n_features))   # [inst, d_hidden, feats]
    W2 = _kaiming_uniform(k_w2, (n_inst, n_features, d_hidden))   # [inst, feats, d_hidden]
    b_final = jnp.zeros((n_inst, n_features), dtype=jnp.float32)  # [inst, feats]

    # generate_batch semantics with feature_probability=1.0: uniform in [-1, 1)
    features = 2.0 * jax.random.uniform(k_x, (batch, n_inst, n_features),
                                        dtype=jnp.float32) - 1.0

    out = neuron_computation_forward(features, W1, W2, b_final)
    out = jax.block_until_ready(out)

    ref = _reference_forward(features, W1, W2, b_final)
    assert out.shape == (batch, n_inst, n_features)
    assert jnp.allclose(out, ref, atol=1e-5, rtol=1e-5)

    print("KERNEL_OK")
</pallas_src>

<mosaic_0001>
module attributes {stable_mosaic.version = 11 : i64} {
  func.func @_neuron_comp_kernel(%arg0: i32, %arg1: memref<8x128xf32, #tpu.memory_space<vmem>>, %arg2: memref<128x32xf32, #tpu.memory_space<vmem>>, %arg3: memref<32x128xf32, #tpu.memory_space<vmem>>, %arg4: memref<1x128xf32, #tpu.memory_space<vmem>>, %arg5: memref<8x128xf32, #tpu.memory_space<vmem>>) attributes {dimension_semantics = [#tpu.dimension_semantics<parallel>], iteration_bounds = array<i64: 2>, scalar_prefetch = 0 : i64, scratch_operands = 0 : i64, tpu.core_type = #tpu.core_type<tc>, window_params = [{transform_indices = @transform_0, window_bounds = array<i64: 8, 128>}, {pipeline_mode = #tpu.pipeline_mode<synchronous>, transform_indices = @transform_1, window_bounds = array<i64: 128, 32>}, {pipeline_mode = #tpu.pipeline_mode<synchronous>, transform_indices = @transform_2, window_bounds = array<i64: 32, 128>}, {pipeline_mode = #tpu.pipeline_mode<synchronous>, transform_indices = @transform_3, window_bounds = array<i64: 1, 128>}, {transform_indices = @transform_4, window_bounds = array<i64: 8, 128>}]} {
    %c0 = arith.constant 0 : index
    %c0_0 = arith.constant 0 : index
    %0 = vector.load %arg1[%c0, %c0_0] : memref<8x128xf32, #tpu.memory_space<vmem>>, vector<8x128xf32>
    %c0_1 = arith.constant 0 : index
    %c0_2 = arith.constant 0 : index
    %1 = vector.load %arg2[%c0_1, %c0_2] : memref<128x32xf32, #tpu.memory_space<vmem>>, vector<128x32xf32>
    %cst = arith.constant dense<0.000000e+00> : vector<8x32xf32>
    %2 = tpu.matmul %0, %1, %cst {dimension_numbers = #tpu.dot_dimension_numbers<[1], [0], [0], [1], [0, 0, 1, 1], [], []>} : vector<8x128xf32>, vector<128x32xf32>, vector<8x32xf32> -> vector<8x32xf32>
    %cst_3 = arith.constant 0.000000e+00 : f32
    %3 = vector.broadcast %cst_3 : f32 to vector<8x32xf32>
    %4 = arith.maximumf %2, %3 : vector<8x32xf32>
    %c0_4 = arith.constant 0 : index
    %c0_5 = arith.constant 0 : index
    %5 = vector.load %arg3[%c0_4, %c0_5] : memref<32x128xf32, #tpu.memory_space<vmem>>, vector<32x128xf32>
    %cst_6 = arith.constant dense<0.000000e+00> : vector<8x128xf32>
    %6 = tpu.matmul %4, %5, %cst_6 {dimension_numbers = #tpu.dot_dimension_numbers<[1], [0], [0], [1], [0, 0, 1, 1], [], []>} : vector<8x32xf32>, vector<32x128xf32>, vector<8x128xf32> -> vector<8x128xf32>
    %c0_7 = arith.constant 0 : index
    %c0_8 = arith.constant 0 : index
    %7 = vector.load %arg4[%c0_7, %c0_8] : memref<1x128xf32, #tpu.memory_space<vmem>>, vector<1x128xf32>
    %8 = vector.broadcast %7 : vector<1x128xf32> to vector<8x128xf32>
    %9 = arith.addf %6, %8 : vector<8x128xf32>
    %cst_9 = arith.constant 0.000000e+00 : f32
    %10 = vector.broadcast %cst_9 : f32 to vector<8x128xf32>
    %11 = arith.maximumf %9, %10 : vector<8x128xf32>
    %c0_10 = arith.constant 0 : index
    %c0_11 = arith.constant 0 : index
    %12 = vector.load %arg5[%c0_10, %c0_11] : memref<8x128xf32, #tpu.memory_space<vmem>>, vector<8x128xf32>
    tpu.vector_store %arg5[%c0_10, %c0_11], %11 {strides = array<i32>} : memref<8x128xf32, #tpu.memory_space<vmem>>, vector<8x128xf32>,
    return
  }
  func.func @transform_0(%arg0: i32) -> (i32, i32) {
    %c0_i32 = arith.constant 0 : i32
    %c0_i32_0 = arith.constant 0 : i32
    return %arg0, %c0_i32 : i32, i32
  }
  func.func @transform_1(%arg0: i32) -> (i32, i32) {
    %c0_i32 = arith.constant 0 : i32
    %c0_i32_0 = arith.constant 0 : i32
    %c0_i32_1 = arith.constant 0 : i32
    return %c0_i32, %c0_i32_0 : i32, i32
  }
  func.func @transform_2(%arg0: i32) -> (i32, i32) {
    %c0_i32 = arith.constant 0 : i32
    %c0_i32_0 = arith.constant 0 : i32
    %c0_i32_1 = arith.constant 0 : i32
    return %c0_i32, %c0_i32_0 : i32, i32
  }
  func.func @transform_3(%arg0: i32) -> (i32, i32) {
    %c0_i32 = arith.constant 0 : i32
    %c0_i32_0 = arith.constant 0 : i32
    %c0_i32_1 = arith.constant 0 : i32
    return %c0_i32, %c0_i32_0 : i32, i32
  }
  func.func @transform_4(%arg0: i32) -> (i32, i32) {
    %c0_i32 = arith.constant 0 : i32
    %c0_i32_0 = arith.constant 0 : i32
    return %arg0, %c0_i32 : i32, i32
  }
}

</mosaic_0001>

<llo_original>
// kernel: neuron_computation_forward.1
$region0: #{neuron_computation_forward.1}
  #allocation0 [shape = 'u32[]', space=smem, size = 0x4, offset = 0x4, fixed_abs, tag = 'smem constant byte address 0x4 - core index']
  #allocation1 [shape = 'u32[144,128]{1,0:T(1,128)}', space=vmem, size = 0x12000, scoped, tag = 'internal scratch']
  %s0 = inlined_call_operand.vmem [shape: f32[16,128], index: 0, kind: input, shape index: {}]
  %s1 = inlined_call_operand.vmem [shape: f32[128,32], index: 1, kind: input, shape index: {}]
  %s2 = inlined_call_operand.vmem [shape: f32[32,128], index: 2, kind: input, shape index: {}]
  %s3 = inlined_call_operand.vmem [shape: f32[1,128], index: 3, kind: input, shape index: {}]
  %s4 = inlined_call_operand.vmem [shape: f32[16,128], index: 4, kind: output, shape index: {}]
  %s5 = sld [smem:[#allocation0]]
  $region49: #{neuron_computation_forward.1} parent=0
    _
  %s7 = ssub.s32 1, %s5
  %s8 = scalar_select 0, %s7, %s5
  loop: start=0, step=1, limit=4
  $region2: #{neuron_computation_forward.1} parent=0 // loop_pre_header
    _
  $region3: #{neuron_computation_forward.1} parent=0 // loop_header
    %s10 = sphi 0, %s14
    %p11 = scmp.ge.s32.totalorder %s10, 4
    %s20 = sphi 0, %s22
    %s23 = sphi 0, %s20
    %s24 = sphi 0, %s23
    %s40 = sphi 0, %s24
    %s44 = sphi 0, %s44
    %s46 = sphi 0, %s44
    %s47 = sphi 0, %s46
    %s61 = sphi 0, %s47
    %s65 = sphi 0, %s65
    %s67 = sphi 0, %s65
    %s68 = sphi 0, %s67
    %s82 = sphi 0, %s68
    %s86 = sphi 0, %s86
    %s88 = sphi 0, %s86
    %s89 = sphi 0, %s88
    %s103 = sphi 0, %s89
    %s109 = sphi 0, %s111
    %s112 = sphi 0, %s109
    %s113 = sphi 0, %s112
    %s129 = sphi 0, %s113
  $region4: #{neuron_computation_forward.1} parent=0 // loop_header_branch
    %13 = sbr.rel (%p11) target = $region8
  $region5: #{neuron_computation_forward.1} parent=0 // loop_body
    %s15 = ssub.s32 %s10, 1
    %s16 = ssub.s32 %s10, 2
    %s17 = sadd.s32 %s10, 1
    %s18 = ssub.s32 %s10, %s17
    %p19 = scmp.eq.s32.totalorder %s18, 0
    %s21 = sadd.s32 %s20, 1
    %s22 = scalar_select %p19, %s20, %s21
    %p25 = pneg %p19
    %p26 = scmp.eq.s32.totalorder %s10, 1
    %p27 = por %p25, %p26
    %p28 = scmp.ne.s32.totalorder %s20, %s23
    %p29 = scmp.eq.s32.totalorder %s10, 0
    %p30 = por %p28, %p29
    %p31 = scmp.ne.s32.totalorder %s20, %s23
    %p32 = scmp.eq.s32.totalorder %s15, 1
    %p33 = por %p31, %p32
    %p34 = scmp.ne.s32.totalorder %s23, %s24
    %p35 = scmp.eq.s32.totalorder %s15, 0
    %p36 = por %p34, %p35
    %p37 = scmp.ne.s32.totalorder %s23, %s24
    %p38 = scmp.eq.s32.totalorder %s16, 1
    %p39 = por %p37, %p38
    %p41 = scmp.ne.s32.totalorder %s24, %s40
    %p42 = scmp.eq.s32.totalorder %s16, 0
    %p43 = por %p41, %p42
    %s45 = sadd.s32 %s44, 1
    %p48 = scmp.eq.s32.totalorder %s10, 1
    %p49 = scmp.ne.s32.totalorder %s44, %s46
    %p50 = scmp.eq.s32.totalorder %s10, 0
    %p51 = por %p49, %p50
    %p52 = scmp.ne.s32.totalorder %s44, %s46
    %p53 = scmp.eq.s32.totalorder %s15, 1
    %p54 = por %p52, %p53
    %p55 = scmp.ne.s32.totalorder %s46, %s47
    %p56 = scmp.eq.s32.totalorder %s15, 0
    %p57 = por %p55, %p56
    %p58 = scmp.ne.s32.totalorder %s46, %s47
    %p59 = scmp.eq.s32.totalorder %s16, 1
    %p60 = por %p58, %p59
    %p62 = scmp.ne.s32.totalorder %s47, %s61
    %p63 = scmp.eq.s32.totalorder %s16, 0
    %p64 = por %p62, %p63
    %s66 = sadd.s32 %s65, 1
    %p69 = scmp.eq.s32.totalorder %s10, 1
    %p70 = scmp.ne.s32.totalorder %s65, %s67
    %p71 = scmp.eq.s32.totalorder %s10, 0
    %p72 = por %p70, %p71
    %p73 = scmp.ne.s32.totalorder %s65, %s67
    %p74 = scmp.eq.s32.totalorder %s15, 1
    %p75 = por %p73, %p74
    %p76 = scmp.ne.s32.totalorder %s67, %s68
    %p77 = scmp.eq.s32.totalorder %s15, 0
    %p78 = por %p76, %p77
    %p79 = scmp.ne.s32.totalorder %s67, %s68
    %p80 = scmp.eq.s32.totalorder %s16, 1
    %p81 = por %p79, %p80
    %p83 = scmp.ne.s32.totalorder %s68, %s82
    %p84 = scmp.eq.s32.totalorder %s16, 0
    %p85 = por %p83, %p84
    %s87 = sadd.s32 %s86, 1
    %p90 = scmp.eq.s32.totalorder %s10, 1
    %p91 = scmp.ne.s32.totalorder %s86, %s88
    %p92 = scmp.eq.s32.totalorder %s10, 0
    %p93 = por %p91, %p92
    %p94 = scmp.ne.s32.totalorder %s86, %s88
    %p95 = scmp.eq.s32.totalorder %s15, 1
    %p96 = por %p94, %p95
    %p97 = scmp.ne.s32.totalorder %s88, %s89
    %p98 = scmp.eq.s32.totalorder %s15, 0
    %p99 = por %p97, %p98
    %p100 = scmp.ne.s32.totalorder %s88, %s89
    %p101 = scmp.eq.s32.totalorder %s16, 1
    %p102 = por %p100, %p101
    %p104 = scmp.ne.s32.totalorder %s89, %s103
    %p105 = scmp.eq.s32.totalorder %s16, 0
    %p106 = por %p104, %p105
    %s107 = ssub.s32 %s10, %s17
    %p108 = scmp.eq.s32.totalorder %s107, 0
    %s110 = sadd.s32 %s109, 1
    %s111 = scalar_select %p108, %s109, %s110
    %p114 = pneg %p108
    %p115 = scmp.eq.s32.totalorder %s10, 1
    %p116 = por %p114, %p115
    %p117 = scmp.ne.s32.totalorder %s109, %s112
    %p118 = scmp.eq.s32.totalorder %s10, 0
    %p119 = por %p117, %p118
    %p120 = scmp.ne.s32.totalorder %s109, %s112
    %p121 = scmp.eq.s32.totalorder %s15, 1
    %p122 = por %p120, %p121
    %p123 = scmp.ne.s32.totalorder %s112, %s113
    %p124 = scmp.eq.s32.totalorder %s15, 0
    %p125 = por %p123, %p124
    %p126 = scmp.ne.s32.totalorder %s112, %s113
    %p127 = scmp.eq.s32.totalorder %s16, 1
    %p128 = por %p126, %p127
    %p130 = scmp.ne.s32.totalorder %s113, %s129
    %p131 = scmp.eq.s32.totalorder %s16, 0
    %p132 = por %p130, %p131
    %p133 = scmp.le.s32.totalorder 1, %s10
    %p134 = scmp.lt.s32.totalorder %s10, 3
    %p135 = pnand %p133, %p134
    %p136 = pneg %p135
    // Predicated region
    $region9: #{neuron_computation_forward.1} parent=5 // pred_check
      _
    $region10: #{neuron_computation_forward.1} parent=5 // pred_check_branch
      %138 = sbr.rel (%p135) target = $region12
    $region11: #{neuron_computation_forward.1} parent=5 // pred_region
      %s139 = ssub.s32 %s10, 1
      // Predicated region
      $region13: #{neuron_computation_forward.1} parent=11 // pred_check
        %p140 = pneg %p57
      $region14: #{neuron_computation_forward.1} parent=11 // pred_check_branch
        %142 = sbr.rel (%p140) target = $region16
      $region15: #{neuron_computation_forward.1} parent=11 // pred_region
        _
      $region16: #{neuron_computation_forward.1} parent=11 // pred_fallthru
        _
      // Predicated region
      $region17: #{neuron_computation_forward.1} parent=11 // pred_check
        %p143 = pneg %p78
      $region18: #{neuron_computation_forward.1} parent=11 // pred_check_branch
        %145 = sbr.rel (%p143) target = $region20
      $region19: #{neuron_computation_forward.1} parent=11 // pred_region
        _
      $region20: #{neuron_computation_forward.1} parent=11 // pred_fallthru
        _
      // Predicated region
      $region21: #{neuron_computation_forward.1} parent=11 // pred_check
        %p146 = pneg %p99
      $region22: #{neuron_computation_forward.1} parent=11 // pred_check_branch
        %148 = sbr.rel (%p146) target = $region24
      $region23: #{neuron_computation_forward.1} parent=11 // pred_region
        _
      $region24: #{neuron_computation_forward.1} parent=11 // pred_fallthru
        _
    $region12: #{neuron_computation_forward.1} parent=5 // pred_fallthru
      _
    %p149 = scmp.lt.s32.totalorder %s10, 2
    // Predicated region
    $region25: #{neuron_computation_forward.1} parent=5 // pred_check
      %p150 = pneg %p149
    $region26: #{neuron_computation_forward.1} parent=5 // pred_check_branch
      %152 = sbr.rel (%p150) target = $region28
    $region27: #{neuron_computation_forward.1} parent=5 // pred_region
      // Predicated region
      $region29: #{neuron_computation_forward.1} parent=27 // pred_check
        %p153 = pneg %p30
      $region30: #{neuron_computation_forward.1} parent=27 // pred_check_branch
        %155 = sbr.rel (%p153) target = $region32
      $region31: #{neuron_computation_forward.1} parent=27 // pred_region
        %p156 = scmp.lt.s32.totalorder %s10, 1
        %s157 = scalar_select %p156, %s10, 1
        %s158 = smul.addr %s157, 8
        %s159 = scalar_lea.vmem %s0, %s158
      $region32: #{neuron_computation_forward.1} parent=27 // pred_fallthru
        _
    $region28: #{neuron_computation_forward.1} parent=5 // pred_fallthru
      _
    %p160 = scmp.le.s32.totalorder 1, %s10
    %p161 = scmp.lt.s32.totalorder %s10, 3
    %p162 = pnand %p160, %p161
    %p163 = pneg %p162
    // Predicated region
    $region33: #{neuron_computation_forward.1} parent=5 // pred_check
      _
    $region34: #{neuron_computation_forward.1} parent=5 // pred_check_branch
      %165 = sbr.rel (%p162) target = $region36
    $region35: #{neuron_computation_forward.1} parent=5 // pred_region
      %s166 = ssub.s32 %s10, 1
      %p167 = scmp.lt.s32.totalorder %s15, 1
      %s168 = scalar_select %p167, %s15, 1
      %s169 = smul.addr %s168, 8
      %s170 = scalar_lea.vmem %s0, %s169
      %p171 = pneg %p36
      %p172 = pneg %p33
      %p173 = pneg %p57
      %p174 = pneg %p54
      %p175 = pneg %p78
      %p176 = pneg %p75
      %p177 = pneg %p99
      %p178 = pneg %p96
      %p179 = pneg %p125
      %p180 = pneg %p122
      %p181 = scmp.lt.s32.totalorder %s15, 1
      %s182 = scalar_select %p181, %s15, 1
      %s183 = smul.addr %s182, 8
      %s184 = scalar_lea.vmem %s4, %s183
      %p185 = scmp.lt.s32.totalorder %s15, 1
      %s186 = scalar_select %p185, %s15, 1
      %s187 = smul.addr %s186, 8
      %s188 = scalar_lea.vmem %s0, %s187
      %p189 = scmp.lt.s32.totalorder %s15, 1
      %s190 = scalar_select %p189, %s15, 1
      %s191 = smul.addr %s190, 8
      %s192 = scalar_lea.vmem %s4, %s191
      %v193 = vld [vmem:[%s188] sm:$0xff]
      %v194 = vld [vmem:[%s1] sm:$0xff]
      %v195 = vld [vmem:[%s1 + $0x8] sm:$0xff]
      %v196 = vld [vmem:[%s1 + $0x10] sm:$0xff]
      %v197 = vld [vmem:[%s1 + $0x18] sm:$0xff]
      %v198 = vld [vmem:[%s1 + $0x20] sm:$0xff]
      %v199 = vld [vmem:[%s1 + $0x28] sm:$0xff]
      %v200 = vld [vmem:[%s1 + $0x30] sm:$0xff]
      %v201 = vld [vmem:[%s1 + $0x38] sm:$0xff]
      %v202 = vld [vmem:[%s1 + $0x40] sm:$0xff]
      %v203 = vld [vmem:[%s1 + $0x48] sm:$0xff]
      %v204 = vld [vmem:[%s1 + $0x50] sm:$0xff]
      %v205 = vld [vmem:[%s1 + $0x58] sm:$0xff]
      %v206 = vld [vmem:[%s1 + $0x60] sm:$0xff]
      %v207 = vld [vmem:[%s1 + $0x68] sm:$0xff]
      %v208 = vld [vmem:[%s1 + $0x70] sm:$0xff]
      %v209 = vld [vmem:[%s1 + $0x78] sm:$0xff]
      %210 = vmatprep.subr.mxu0 0.0
      %211 = vmatpush1.msra.mxu0 %v194
      %212 = vmatprep.subr.mxu0 0.0
      %213 = vmatpush1.msra.mxu0 %v195
      %214 = vmatprep.subr.mxu0 0.0
      %215 = vmatpush1.msra.mxu0 %v196
      %216 = vmatprep.subr.mxu0 0.0
      %217 = vmatpush1.msra.mxu0 %v197
      %218 = vmatprep.subr.mxu0 0.0
      %219 = vmatpush1.msra.mxu0 %v198
      %220 = vmatprep.subr.mxu0 0.0
      %221 = vmatpush1.msra.mxu0 %v199
      %222 = vmatprep.subr.mxu0 0.0
      %223 = vmatpush1.msra.mxu0 %v200
      %224 = vmatprep.subr.mxu0 0.0
      %225 = vmatpush1.msra.mxu0 %v201
      %226 = vmatprep.subr.mxu0 0.0
      %227 = vmatpush1.msra.mxu0 %v202
      %228 = vmatprep.subr.mxu0 0.0
      %229 = vmatpush1.msra.mxu0 %v203
      %230 = vmatprep.subr.mxu0 0.0
      %231 = vmatpush1.msra.mxu0 %v204
      %232 = vmatprep.subr.mxu0 0.0
      %233 = vmatpush1.msra.mxu0 %v205
      %234 = vmatprep.subr.mxu0 0.0
      %235 = vmatpush1.msra.mxu0 %v206
      %236 = vmatprep.subr.mxu0 0.0
      %237 = vmatpush1.msra.mxu0 %v207
      %238 = vmatprep.subr.mxu0 0.0
      %239 = vmatpush1.msra.mxu0 %v208
      %240 = vmatprep.subr.mxu0 0.0
      %241 = vmatpush1.msra.mxu0 %v209
      %242 = vmatprep.subr.mxu0 0.0
      %243 = vmatpush1.msra.mxu0 0.0
      %244 = vmatprep.subr.mxu0 0.0
      %245 = vmatpush1.msra.mxu0 0.0
      %246 = vmatprep.subr.mxu0 0.0
      %247 = vmatpush1.msra.mxu0 0.0
      %248 = vmatprep.subr.mxu0 0.0
      %249 = vmatpush1.msra.mxu0 0.0
      %250 = vmatprep.subr.mxu0 0.0
      %251 = vmatpush1.msra.mxu0 0.0
      %252 = vmatprep.subr.mxu0 0.0
      %253 = vmatpush1.msra.mxu0 0.0
      %254 = vmatprep.subr.mxu0 0.0
      %255 = vmatpush1.msra.mxu0 0.0
      %256 = vmatprep.subr.mxu0 0.0
      %257 = vmatpush1.msra.mxu0 0.0
      %258 = vmatprep.subr.mxu0 0.0
      %259 = vmatpush1.msra.mxu0 0.0
      %260 = vmatprep.subr.mxu0 0.0
      %261 = vmatpush1.msra.mxu0 0.0
      %262 = vmatprep.subr.mxu0 0.0
      %263 = vmatpush1.msra.mxu0 0.0
      %264 = vmatprep.subr.mxu0 0.0
      %265 = vmatpush1.msra.mxu0 0.0
      %266 = vmatprep.subr.mxu0 0.0
      %267 = vmatpush1.msra.mxu0 0.0
      %268 = vmatprep.subr.mxu0 0.0
      %269 = vmatpush1.msra.mxu0 0.0
      %270 = vmatprep.subr.mxu0 0.0
      %271 = vmatpush1.msra.mxu0 0.0
      %272 = vmatprep.subr.mxu0 0.0
      %273 = vmatpush1.msra.mxu0 0.0
      %274 = vmatprep.mubr.f32.mxu0 0.0
      %275 = vmatmul.mubr.f32.gmra.mrb[0].mxu0 %v193
      %v276 = vpop.f32.mrb[0].mxu0
      %v277 = vadd.f32 0.0, %v276
      %v278 = vpop.f32.mrb[0].mxu0
      %279 = vdwg.mxu0
      %v280 = vmax.f32 %v277, 0.0
      %v281 = vld [vmem:[%s2] sm:$0xff]
      %v282 = vld [vmem:[%s2 + $0x8] sm:$0xff]
      %v283 = vld [vmem:[%s2 + $0x10] sm:$0xff]
      %v284 = vld [vmem:[%s2 + $0x18] sm:$0xff]
      %v285 = vld [vmem:[%s3] sm:$0x1]
      %v287 = vlaneseq
      %v288 = vshrl.u32 %v287, 7
      %v289 = vsub.s32 0, %v288
      %v290 = vrot.slane %v285, %v289
      %vm292 = vcmask 261120
      %v294 = vsel %vm292, %v280, 0
      %296 = vmatprep.subr.mxu0 0.0
      %297 = vmatpush1.msra.mxu0 %v281
      %298 = vmatprep.subr.mxu0 0.0
      %299 = vmatpush1.msra.mxu0 %v282
      %300 = vmatprep.subr.mxu0 0.0
      %301 = vmatpush1.msra.mxu0 %v283
      %302 = vmatprep.subr.mxu0 0.0
      %303 = vmatpush1.msra.mxu0 %v284
      %304 = vmatprep.subr.mxu0 0.0
      %305 = vmatpush1.msra.mxu0 0.0
      %306 = vmatprep.subr.mxu0 0.0
      %307 = vmatpush1.msra.mxu0 0.0
      %308 = vmatprep.subr.mxu0 0.0
      %309 = vmatpush1.msra.mxu0 0.0
      %310 = vmatprep.subr.mxu0 0.0
      %311 = vmatpush1.msra.mxu0 0.0
      %312 = vmatprep.subr.mxu0 0.0
      %313 = vmatpush1.msra.mxu0 0.0
      %314 = vmatprep.subr.mxu0 0.0
      %315 = vmatpush1.msra.mxu0 0.0
      %316 = vmatprep.subr.mxu0 0.0
      %317 = vmatpush1.msra.mxu0 0.0
      %318 = vmatprep.subr.mxu0 0.0
      %319 = vmatpush1.msra.mxu0 0.0
      %320 = vmatprep.subr.mxu0 0.0
      %321 = vmatpush1.msra.mxu0 0.0
      %322 = vmatprep.subr.mxu0 0.0
      %323 = vmatpush1.msra.mxu0 0.0
      %324 = vmatprep.subr.mxu0 0.0
      %325 = vmatpush1.msra.mxu0 0.0
      %326 = vmatprep.subr.mxu0 0.0
      %327 = vmatpush1.msra.mxu0 0.0
      %328 = vmatprep.subr.mxu0 0.0
      %329 = vmatpush1.msra.mxu0 0.0
      %330 = vmatprep.subr.mxu0 0.0
      %331 = vmatpush1.msra.mxu0 0.0
      %332 = vmatprep.subr.mxu0 0.0
      %333 = vmatpush1.msra.mxu0 0.0
      %334 = vmatprep.subr.mxu0 0.0
      %335 = vmatpush1.msra.mxu0 0.0
      %336 = vmatprep.subr.mxu0 0.0
      %337 = vmatpush1.msra.mxu0 0.0
      %338 = vmatprep.subr.mxu0 0.0
      %339 = vmatpush1.msra.mxu0 0.0
      %340 = vmatprep.subr.mxu0 0.0
      %341 = vmatpush1.msra.mxu0 0.0
      %342 = vmatprep.subr.mxu0 0.0
      %343 = vmatpush1.msra.mxu0 0.0
      %344 = vmatprep.subr.mxu0 0.0
      %345 = vmatpush1.msra.mxu0 0.0
      %346 = vmatprep.subr.mxu0 0.0
      %347 = vmatpush1.msra.mxu0 0.0
      %348 = vmatprep.subr.mxu0 0.0
      %349 = vmatpush1.msra.mxu0 0.0
      %350 = vmatprep.subr.mxu0 0.0
      %351 = vmatpush1.msra.mxu0 0.0
      %352 = vmatprep.subr.mxu0 0.0
      %353 = vmatpush1.msra.mxu0 0.0
      %354 = vmatprep.subr.mxu0 0.0
      %355 = vmatpush1.msra.mxu0 0.0
      %356 = vmatprep.subr.mxu0 0.0
      %357 = vmatpush1.msra.mxu0 0.0
      %358 = vmatprep.subr.mxu0 0.0
      %359 = vmatpush1.msra.mxu0 0.0
      %360 = vmatprep.mubr.f32.mxu0 0.0
      %361 = vmatmul.mubr.f32.gmra.mrb[0].mxu0 %v294
      %v362 = vpop.f32.mrb[0].mxu0
      %v363 = vadd.f32 %v290, %v362
      %v364 = vpop.f32.mrb[0].mxu0
      %365 = vdwg.mxu0
      %v366 = vmax.f32 %v363, 0.0
      %367 = vst [vmem:[%s192] sm:$0xff] %v366
      %p368 = scmp.lt.s32.totalorder %s15, 1
      %s369 = scalar_select %p368, %s15, 1
      %s370 = smul.addr %s369, 8
      %s371 = scalar_lea.vmem %s4, %s370
      // Predicated region
      $region37: #{neuron_computation_forward.1} parent=35 // pred_check
        %p372 = pneg %p122
      $region38: #{neuron_computation_forward.1} parent=35 // pred_check_branch
        %374 = sbr.rel (%p372) target = $region40
      $region39: #{neuron_computation_forward.1} parent=35 // pred_region
        _
      $region40: #{neuron_computation_forward.1} parent=35 // pred_fallthru
        _
    $region36: #{neuron_computation_forward.1} parent=5 // pred_fallthru
      _
    %p375 = scmp.le.s32.totalorder 2, %s10
    // Predicated region
    $region41: #{neuron_computation_forward.1} parent=5 // pred_check
      %p376 = pneg %p375
    $region42: #{neuron_computation_forward.1} parent=5 // pred_check_branch
      %378 = sbr.rel (%p376) target = $region44
    $region43: #{neuron_computation_forward.1} parent=5 // pred_region
      %s379 = ssub.s32 %s10, 2
      // Predicated region
      $region45: #{neuron_computation_forward.1} parent=43 // pred_check
        %p380 = pneg %p128
      $region46: #{neuron_computation_forward.1} parent=43 // pred_check_branch
        %382 = sbr.rel (%p380) target = $region48
      $region47: #{neuron_computation_forward.1} parent=43 // pred_region
        %p383 = scmp.lt.s32.totalorder %s16, 1
        %s384 = scalar_select %p383, %s16, 1
        %s385 = smul.addr %s384, 8
        %s386 = scalar_lea.vmem %s4, %s385
      $region48: #{neuron_computation_forward.1} parent=43 // pred_fallthru
        _
    $region44: #{neuron_computation_forward.1} parent=5 // pred_fallthru
      _
  $region6: #{neuron_computation_forward.1} parent=0 // loop_footer
    %s14 = sadd.s32 1, %s10
  $region7: #{neuron_computation_forward.1} parent=0 // loop_footer_branch
    %9 = sbr.rel target = $region3
  $region8: #{neuron_computation_forward.1} parent=0 // loop_exit
    _

</llo_original>
